<compile_context>
chip_gen: v7x
topology: tpu7x:2x2x1
jax: 0.10.0
libtpu: 0.0.40
codegen_flags: <defaults>
</compile_context>

<pallas_src>
import functools

import jax
import jax.numpy as jnp
from jax.experimental import pallas as pl
from jax.experimental.pallas import tpu as pltpu

_LANE = 128
_VMEM_LIMIT_BYTES = 32 * 1024 * 1024  # safe on v5e/v6e/v7x


def _round_up(x, m):
    return ((x + m - 1) // m) * m


# ----------------------------------------------------------------------------
# Kernel 1: selection-policy FFN (transposed: moves on the lane axis)
# ----------------------------------------------------------------------------
def _policy_kernel(sel_ref, cls_ref, *refs, num_layers):
    """Grid step (m, j): policy logits for TN moves of batch row m.

    sel_ref: (1, E*S, TN) bf16  selection features, moves on lanes
    cls_ref: (1, E, 1)    bf16  cls embedding column of batch row m
    refs   : w0_selT, w0_clsT, b0, [w1T, b1, ...], out_ref
             wT: (d_out_p, d_in_p) bf16 ; b: (d_out_p, 1) f32
    out_ref: (1, 1, TN) f32  (lane-dense store)
    """
    o_ref = refs[-1]
    w_refs = refs[:-1]

    sel = sel_ref[0]                     # (E*S, TN) bf16
    clsv = cls_ref[0]                    # (E, 1)    bf16

    # layer 0: selection part + cls part (cls computed once per batch row,
    # broadcast over the TN move lanes).
    h = jnp.dot(w_refs[0][...], sel, preferred_element_type=jnp.float32)
    h = h + jnp.dot(w_refs[1][...], clsv, preferred_element_type=jnp.float32)
    h = h + w_refs[2][...]
    if num_layers > 1:
        h = jnp.maximum(h, 0.0)          # ReLU on hidden layers only (f32)

    for l in range(1, num_layers):
        w = w_refs[3 + 2 * (l - 1)][...]
        b = w_refs[4 + 2 * (l - 1)][...]
        h = jnp.dot(w, h.astype(w.dtype),
                    preferred_element_type=jnp.float32) + b
        if l < num_layers - 1:
            h = jnp.maximum(h, 0.0)

    o_ref[0] = h.astype(o_ref.dtype)     # (1, TN) lane-dense


def _pick_move_tile(nm_padded):
    for cand in (512, 256):
        if nm_padded % cand == 0:
            return cand
    return _LANE


def policy_forward(sel_T, cls_col, kparams, num_layers, num_moves):
    """sel_T: (M, E*S, num_moves) f32, cls_col: (M, E, 1) bf16."""
    M, ES, NM = sel_T.shape
    E = cls_col.shape[1]

    NMp = _round_up(max(NM, 1), _LANE)
    TN = _pick_move_tile(NMp)                   # largest of 512/256/128 that fits
    sel_pad = jnp.pad(sel_T, ((0, 0), (0, 0), (0, NMp - NM))
                      ).astype(jnp.bfloat16)

    grid = (M, NMp // TN)
    in_specs = [
        pl.BlockSpec((1, ES, TN), lambda m, j: (m, 0, j)),
        pl.BlockSpec((1, E, 1), lambda m, j: (m, 0, 0)),
    ]
    for a in kparams:                           # weights/biases stay resident
        in_specs.append(pl.BlockSpec(a.shape, lambda m, j: (0, 0)))

    out = pl.pallas_call(
        functools.partial(_policy_kernel, num_layers=num_layers),
        grid=grid,
        in_specs=in_specs,
        out_specs=pl.BlockSpec((1, 1, TN), lambda m, j: (m, 0, j)),
        out_shape=jax.ShapeDtypeStruct((M, 1, NMp), jnp.float32),
        compiler_params=pltpu.CompilerParams(
            dimension_semantics=("parallel", "parallel"),
            vmem_limit_bytes=_VMEM_LIMIT_BYTES),
    )(sel_pad, cls_col, *kparams)
    return out[:, 0, :NM]                       # (M, num_moves)


# ----------------------------------------------------------------------------
# Kernel 2: fused value_net + special_net (single pass over cls_embedding)
# ----------------------------------------------------------------------------
def _cls_heads_kernel(x_ref, *refs, num_value_layers, num_special_layers):
    nv = 2 * num_value_layers
    ns = 2 * num_special_layers
    v_params = refs[:nv]
    s_params = refs[nv:nv + ns]
    outs = refs[nv + ns:]

    x = x_ref[...]                               # (M, E) bf16

    def chain(params, n_layers):
        h = x
        for l in range(n_layers):
            w = params[2 * l][...]
            b = params[2 * l + 1][...]
            h = jnp.dot(h.astype(w.dtype), w,
                        preferred_element_type=jnp.float32) + b
            if l < n_layers - 1:
                h = jnp.maximum(h, 0.0)
        return h

    outs[0][...] = chain(v_params, num_value_layers).astype(outs[0].dtype)
    if num_special_layers:
        outs[1][...] = chain(s_params, num_special_layers).astype(outs[1].dtype)


def cls_heads_forward(cls_bf16, value_kparams, special_kparams,
                      num_players, num_special_moves):
    """Outputs are produced lane-padded (unmasked stores) and sliced here."""
    M = cls_bf16.shape[0]
    vmem = pl.BlockSpec(memory_space=pltpu.MemorySpace.VMEM)
    flat_inputs = [cls_bf16] + list(value_kparams) + list(special_kparams)
    has_special = bool(special_kparams)

    vp_out = value_kparams[-1].shape[-1]        # lane-padded value output dim
    if has_special:
        sp_out = special_kparams[-1].shape[-1]  # lane-padded special output dim
        out_shape = (jax.ShapeDtypeStruct((M, vp_out), jnp.float32),
                     jax.ShapeDtypeStruct((M, sp_out), jnp.float32))
        out_specs = (vmem, vmem)
    else:
        out_shape = jax.ShapeDtypeStruct((M, vp_out), jnp.float32)
        out_specs = vmem

    res = pl.pallas_call(
        functools.partial(_cls_heads_kernel,
                          num_value_layers=len(value_kparams) // 2,
                          num_special_layers=len(special_kparams) // 2),
        in_specs=[vmem] * len(flat_inputs),
        out_specs=out_specs,
        out_shape=out_shape,
        compiler_params=pltpu.CompilerParams(
            vmem_limit_bytes=_VMEM_LIMIT_BYTES),
    )(*flat_inputs)

    if has_special:
        return res[0][:, :num_players], res[1][:, :num_special_moves]
    return res[:, :num_players], None


# ----------------------------------------------------------------------------
# Parameter construction (nn.Linear-style uniform init) and kernel prep
# ----------------------------------------------------------------------------
def make_ffn_params(key, input_dim, output_dim, hidden_layers):
    dims = [input_dim] + list(hidden_layers or []) + [output_dim]
    params = []
    for l in range(len(dims) - 1):
        key, kw, kb = jax.random.split(key, 3)
        bound = 1.0 / (dims[l] ** 0.5)
        w = jax.random.uniform(kw, (dims[l], dims[l + 1]), jnp.float32,
                               -bound, bound)
        b = jax.random.uniform(kb, (dims[l + 1],), jnp.float32, -bound, bound)
        params.append((w, b))
    return params


def _padded_dims(params, pad_output=False):
    """Pad hidden dims (and optionally the output dim) up to lane multiples."""
    L = len(params)
    dims = [params[0][0].shape[0]] + [w.shape[1] for (w, _) in params]
    pdims = list(dims)
    end = L + 1 if pad_output else L
    for i in range(1, end):
        pdims[i] = _round_up(dims[i], _LANE)
    return dims, pdims


def prepare_cls_kernel_params(params):
    """Natural orientation: w (din_p, dout_p) bf16, b (1, dout_p) f32.

    Output dim is lane-padded too so the kernel's final store is unmasked;
    the wrapper slices back to the logical width.  Exact (zero padding).
    """
    dims, pdims = _padded_dims(params, pad_output=True)
    flat = []
    for l, (w, b) in enumerate(params):
        wp = jnp.zeros((pdims[l], pdims[l + 1]), jnp.float32)
        wp = wp.at[:dims[l], :dims[l + 1]].set(w)
        bp = jnp.zeros((pdims[l + 1],), jnp.float32).at[:dims[l + 1]].set(b)
        flat.append(wp.astype(jnp.bfloat16))
        flat.append(bp.reshape(1, -1))
    return flat


def prepare_policy_kernel_params(params, embedding_dim, selection_size):
    """Transposed orientation; first layer split into selection / cls parts."""
    L = len(params)
    dims, pdims = _padded_dims(params, pad_output=False)
    ES = embedding_dim * selection_size

    w0, b0 = params[0]
    assert w0.shape[0] == ES + embedding_dim
    w0_sel, w0_cls = w0[:ES], w0[ES:]
    h1p = pdims[1]
    w0_selT = jnp.zeros((h1p, ES), jnp.float32).at[:dims[1], :].set(w0_sel.T)
    w0_clsT = jnp.zeros((h1p, embedding_dim), jnp.float32
                        ).at[:dims[1], :].set(w0_cls.T)
    b0c = jnp.zeros((h1p, 1), jnp.float32).at[:dims[1], 0].set(b0)

    flat = [w0_selT.astype(jnp.bfloat16), w0_clsT.astype(jnp.bfloat16), b0c]
    for l in range(1, L):
        w, b = params[l]
        wT = jnp.zeros((pdims[l + 1], pdims[l]), jnp.float32
                       ).at[:dims[l + 1], :dims[l]].set(w.T)
        bc = jnp.zeros((pdims[l + 1], 1), jnp.float32).at[:dims[l + 1], 0].set(b)
        flat.append(wT.astype(jnp.bfloat16))
        flat.append(bc)
    return flat


# ----------------------------------------------------------------------------
# PolicyValue module (JAX/Pallas)
# ----------------------------------------------------------------------------
class PolicyValuePallas:
    def __init__(self, embedding_dim, selection_size, num_special_moves,
                 num_players, policy_hidden_layers=None,
                 value_hidden_layers=None, special_hidden_layers=None,
                 key=None):
        self.embedding_dim = embedding_dim
        self.selection_size = selection_size
        self.num_special_moves = num_special_moves
        self.num_players = num_players

        key = key if key is not None else jax.random.PRNGKey(0)
        k1, k2, k3 = jax.random.split(key, 3)
        self.policy_params = make_ffn_params(
            k1, embedding_dim * (1 + selection_size), 1, policy_hidden_layers)
        self.value_params = make_ffn_params(
            k2, embedding_dim, num_players, value_hidden_layers)
        self.special_params = (
            make_ffn_params(k3, embedding_dim, num_special_moves,
                            special_hidden_layers)
            if num_special_moves else None)

        # Kernel-ready parameters (padded / transposed / bf16).
        self._policy_k = prepare_policy_kernel_params(
            self.policy_params, embedding_dim, selection_size)
        self._num_policy_layers = len(self.policy_params)
        self._value_k = prepare_cls_kernel_params(self.value_params)
        self._special_k = (prepare_cls_kernel_params(self.special_params)
                           if num_special_moves else [])

    # -- glue: data-dependent gather -> (M, S*E, num_moves) ------------------
    def _build_selection_features_T(self, embedding, selection_moves):
        num_moves, S, N = selection_moves.shape
        parts = []
        for k in range(S):
            idx = tuple(selection_moves[:, k, d] for d in range(N))
            parts.append(embedding[(slice(None),) + idx])   # (M, num_moves, E)
        sel = jnp.concatenate(parts, axis=-1)                # (M, num_moves, S*E)
        return jnp.swapaxes(sel, 1, 2)                       # (M, S*E, num_moves)

    def forward(self, embedding, cls_embedding, selection_moves,
                special_move_idxs, softmax=False):
        """
        embedding:         (M, D1, ..., DN, E) f32
        cls_embedding:     (M, E) f32
        selection_moves:   (num_moves, selection_size, N) int32
        special_move_idxs: (num_special_selected,) int32
        returns policy (M, num_moves + num_special_selected), value (M, P)
        """
        num_moves = selection_moves.shape[0]

        cls_bf16 = cls_embedding.astype(jnp.bfloat16)
        cls_col = cls_bf16[:, :, None]                       # (M, E, 1)

        sel_T = self._build_selection_features_T(embedding, selection_moves)
        policy = policy_forward(sel_T, cls_col, self._policy_k,
                                self._num_policy_layers, num_moves)

        value, special_all = cls_heads_forward(
            cls_bf16, self._value_k, self._special_k,
            self.num_players, self.num_special_moves)

        if self.num_special_moves:
            special_policy = special_all[:, special_move_idxs]  # glue gather
            policy = jnp.concatenate((policy, special_policy), axis=1)
        if softmax:
            policy = jax.nn.softmax(policy, axis=-1)             # glue (optional)
        return policy, value


# ----------------------------------------------------------------------------
# Pure-JAX reference (mirrors bf16-input / f32-accumulate math)
# ----------------------------------------------------------------------------
def _ffn_ref(x, params):
    h = x
    L = len(params)
    for l, (w, b) in enumerate(params):
        h = jnp.dot(h.astype(jnp.bfloat16), w.astype(jnp.bfloat16),
                    preferred_element_type=jnp.float32) + b
        if l < L - 1:
            h = jnp.maximum(h, 0.0)
    return h


def _forward_ref(mod, embedding, cls_embedding, selection_moves,
                 special_move_idxs):
    M, E = cls_embedding.shape
    num_moves, S, N = selection_moves.shape
    parts = []
    for k in range(S):
        idx = tuple(selection_moves[:, k, d] for d in range(N))
        parts.append(embedding[(slice(None),) + idx])
    parts.append(jnp.broadcast_to(cls_embedding[:, None, :],
                                  (M, num_moves, E)))
    selections = jnp.concatenate(parts, axis=-1)
    policy = _ffn_ref(selections.reshape(M * num_moves, -1),
                      mod.policy_params).reshape(M, num_moves)
    if mod.num_special_moves:
        sp = _ffn_ref(cls_embedding, mod.special_params)[:, special_move_idxs]
        policy = jnp.concatenate((policy, sp), axis=1)
    value = _ffn_ref(cls_embedding, mod.value_params)
    return policy, value


if __name__ == "__main__":
    # small, deterministic example shapes
    M = 2                 # batch
    E = 32                # embedding_dim
    D1, D2 = 4, 4         # spatial board dims (N = 2)
    S = 2                 # selection_size
    num_moves = 8
    num_special_moves = 5
    num_players = 2

    key = jax.random.PRNGKey(0)
    k_emb, k_cls, k_mov, k_par = jax.random.split(key, 4)

    embedding = jax.random.normal(k_emb, (M, D1, D2, E), jnp.float32)
    cls_embedding = jax.random.normal(k_cls, (M, E), jnp.float32)
    selection_moves = jax.random.randint(k_mov, (num_moves, S, 2), 0, D1,
                                         dtype=jnp.int32)
    special_move_idxs = jnp.array([0, 2, 4], dtype=jnp.int32)

    mod = PolicyValuePallas(
        embedding_dim=E,
        selection_size=S,
        num_special_moves=num_special_moves,
        num_players=num_players,
        policy_hidden_layers=[64],
        value_hidden_layers=[64],
        special_hidden_layers=[64],
        key=k_par,
    )

    policy, value = mod.forward(embedding, cls_embedding, selection_moves,
                                special_move_idxs, softmax=False)
    jax.block_until_ready((policy, value))

    policy_ref, value_ref = _forward_ref(mod, embedding, cls_embedding,
                                         selection_moves, special_move_idxs)
    assert policy.shape == (M, num_moves + special_move_idxs.shape[0])
    assert value.shape == (M, num_players)
    assert jnp.allclose(policy, policy_ref, atol=1e-2, rtol=1e-2)
    assert jnp.allclose(value, value_ref, atol=1e-2, rtol=1e-2)

    print("KERNEL_OK")
</pallas_src>

<mosaic_0001>
module attributes {stable_mosaic.version = 11 : i64} {
  func.func @_policy_kernel(%arg0: i32, %arg1: i32, %arg2: memref<1x64x128xbf16, #tpu.memory_space<vmem>>, %arg3: memref<1x32x1xbf16, #tpu.memory_space<vmem>>, %arg4: memref<128x64xbf16, #tpu.memory_space<vmem>>, %arg5: memref<128x32xbf16, #tpu.memory_space<vmem>>, %arg6: memref<128x1xf32, #tpu.memory_space<vmem>>, %arg7: memref<1x128xbf16, #tpu.memory_space<vmem>>, %arg8: memref<1x1xf32, #tpu.memory_space<vmem>>, %arg9: memref<1x1x128xf32, #tpu.memory_space<vmem>>) attributes {dimension_semantics = [#tpu.dimension_semantics<parallel>, #tpu.dimension_semantics<parallel>], iteration_bounds = array<i64: 2, 1>, scalar_prefetch = 0 : i64, scratch_operands = 0 : i64, tpu.core_type = #tpu.core_type<tc>, window_params = [{transform_indices = @transform_0, window_bounds = array<i64: 1, 64, 128>}, {transform_indices = @transform_1, window_bounds = array<i64: 1, 32, 1>}, {pipeline_mode = #tpu.pipeline_mode<synchronous>, transform_indices = @transform_2, window_bounds = array<i64: 128, 64>}, {pipeline_mode = #tpu.pipeline_mode<synchronous>, transform_indices = @transform_3, window_bounds = array<i64: 128, 32>}, {pipeline_mode = #tpu.pipeline_mode<synchronous>, transform_indices = @transform_4, window_bounds = array<i64: 128, 1>}, {pipeline_mode = #tpu.pipeline_mode<synchronous>, transform_indices = @transform_5, window_bounds = array<i64: 1, 128>}, {pipeline_mode = #tpu.pipeline_mode<synchronous>, transform_indices = @transform_6, window_bounds = array<i64: 1, 1>}, {transform_indices = @transform_7, window_bounds = array<i64: 1, 1, 128>}]} {
    %c0 = arith.constant 0 : index
    %c0_0 = arith.constant 0 : index
    %c0_1 = arith.constant 0 : index
    %0 = vector.load %arg2[%c0, %c0_0, %c0_1] : memref<1x64x128xbf16, #tpu.memory_space<vmem>>, vector<1x64x128xbf16>
    %1 = vector.shape_cast %0 : vector<1x64x128xbf16> to vector<64x128xbf16>
    %c0_2 = arith.constant 0 : index
    %c0_3 = arith.constant 0 : index
    %c0_4 = arith.constant 0 : index
    %2 = vector.load %arg3[%c0_2, %c0_3, %c0_4] : memref<1x32x1xbf16, #tpu.memory_space<vmem>>, vector<1x32x1xbf16>
    %3 = vector.shape_cast %2 : vector<1x32x1xbf16> to vector<32x1xbf16>
    %c0_5 = arith.constant 0 : index
    %c0_6 = arith.constant 0 : index
    %4 = vector.load %arg4[%c0_5, %c0_6] : memref<128x64xbf16, #tpu.memory_space<vmem>>, vector<128x64xbf16>
    %cst = arith.constant dense<0.000000e+00> : vector<128x128xf32>
    %5 = tpu.matmul %4, %1, %cst {dimension_numbers = #tpu.dot_dimension_numbers<[1], [0], [0], [1], [0, 0, 1, 1], [], []>} : vector<128x64xbf16>, vector<64x128xbf16>, vector<128x128xf32> -> vector<128x128xf32>
    %c0_7 = arith.constant 0 : index
    %c0_8 = arith.constant 0 : index
    %6 = vector.load %arg5[%c0_7, %c0_8] : memref<128x32xbf16, #tpu.memory_space<vmem>>, vector<128x32xbf16>
    %cst_9 = arith.constant dense<0.000000e+00> : vector<128x1xf32>
    %7 = tpu.matmul %6, %3, %cst_9 {dimension_numbers = #tpu.dot_dimension_numbers<[1], [0], [0], [1], [0, 0, 1, 1], [], []>} : vector<128x32xbf16>, vector<32x1xbf16>, vector<128x1xf32> -> vector<128x1xf32>
    %8 = vector.broadcast %7 : vector<128x1xf32> to vector<128x128xf32>
    %9 = arith.addf %5, %8 : vector<128x128xf32>
    %c0_10 = arith.constant 0 : index
    %c0_11 = arith.constant 0 : index
    %10 = vector.load %arg6[%c0_10, %c0_11] : memref<128x1xf32, #tpu.memory_space<vmem>>, vector<128x1xf32>
    %11 = vector.broadcast %10 : vector<128x1xf32> to vector<128x128xf32>
    %12 = arith.addf %9, %11 : vector<128x128xf32>
    %cst_12 = arith.constant 0.000000e+00 : f32
    %13 = vector.broadcast %cst_12 : f32 to vector<128x128xf32>
    %14 = arith.maximumf %12, %13 : vector<128x128xf32>
    %c0_13 = arith.constant 0 : index
    %c0_14 = arith.constant 0 : index
    %15 = vector.load %arg7[%c0_13, %c0_14] : memref<1x128xbf16, #tpu.memory_space<vmem>>, vector<1x128xbf16>
    %c0_15 = arith.constant 0 : index
    %c0_16 = arith.constant 0 : index
    %16 = vector.load %arg8[%c0_15, %c0_16] : memref<1x1xf32, #tpu.memory_space<vmem>>, vector<1x1xf32>
    %17 = arith.truncf %14 : vector<128x128xf32> to vector<128x128xbf16>
    %cst_17 = arith.constant dense<0.000000e+00> : vector<1x128xf32>
    %18 = tpu.matmul %15, %17, %cst_17 {dimension_numbers = #tpu.dot_dimension_numbers<[1], [0], [0], [1], [0, 0, 1, 1], [], []>} : vector<1x128xbf16>, vector<128x128xbf16>, vector<1x128xf32> -> vector<1x128xf32>
    %19 = vector.broadcast %16 : vector<1x1xf32> to vector<1x128xf32>
    %20 = arith.addf %18, %19 : vector<1x128xf32>
    %c0_18 = arith.constant 0 : index
    %c0_19 = arith.constant 0 : index
    %c0_20 = arith.constant 0 : index
    %21 = vector.load %arg9[%c0_18, %c0_19, %c0_20] : memref<1x1x128xf32, #tpu.memory_space<vmem>>, vector<1x1x128xf32>
    %22 = vector.shape_cast %21 : vector<1x1x128xf32> to vector<1x128xf32>
    %23 = vector.shape_cast %20 : vector<1x128xf32> to vector<1x1x128xf32>
    tpu.vector_store %arg9[%c0_18, %c0_19, %c0_20], %23 {strides = array<i32>} : memref<1x1x128xf32, #tpu.memory_space<vmem>>, vector<1x1x128xf32>,
    return
  }
  func.func @transform_0(%arg0: i32, %arg1: i32) -> (i32, i32, i32) {
    %c0_i32 = arith.constant 0 : i32
    %c0_i32_0 = arith.constant 0 : i32
    return %arg0, %c0_i32, %arg1 : i32, i32, i32
  }
  func.func @transform_1(%arg0: i32, %arg1: i32) -> (i32, i32, i32) {
    %c0_i32 = arith.constant 0 : i32
    %c0_i32_0 = arith.constant 0 : i32
    %c0_i32_1 = arith.constant 0 : i32
    return %arg0, %c0_i32, %c0_i32_0 : i32, i32, i32
  }
  func.func @transform_2(%arg0: i32, %arg1: i32) -> (i32, i32) {
    %c0_i32 = arith.constant 0 : i32
    %c0_i32_0 = arith.constant 0 : i32
    %c0_i32_1 = arith.constant 0 : i32
    return %c0_i32, %c0_i32_0 : i32, i32
  }
  func.func @transform_3(%arg0: i32, %arg1: i32) -> (i32, i32) {
    %c0_i32 = arith.constant 0 : i32
    %c0_i32_0 = arith.constant 0 : i32
    %c0_i32_1 = arith.constant 0 : i32
    return %c0_i32, %c0_i32_0 : i32, i32
  }
  func.func @transform_4(%arg0: i32, %arg1: i32) -> (i32, i32) {
    %c0_i32 = arith.constant 0 : i32
    %c0_i32_0 = arith.constant 0 : i32
    %c0_i32_1 = arith.constant 0 : i32
    return %c0_i32, %c0_i32_0 : i32, i32
  }
  func.func @transform_5(%arg0: i32, %arg1: i32) -> (i32, i32) {
    %c0_i32 = arith.constant 0 : i32
    %c0_i32_0 = arith.constant 0 : i32
    %c0_i32_1 = arith.constant 0 : i32
    return %c0_i32, %c0_i32_0 : i32, i32
  }
  func.func @transform_6(%arg0: i32, %arg1: i32) -> (i32, i32) {
    %c0_i32 = arith.constant 0 : i32
    %c0_i32_0 = arith.constant 0 : i32
    %c0_i32_1 = arith.constant 0 : i32
    return %c0_i32, %c0_i32_0 : i32, i32
  }
  func.func @transform_7(%arg0: i32, %arg1: i32) -> (i32, i32, i32) {
    %c0_i32 = arith.constant 0 : i32
    %c0_i32_0 = arith.constant 0 : i32
    return %arg0, %c0_i32, %arg1 : i32, i32, i32
  }
}

</mosaic_0001>

<llo_original>
// kernel: tpu_custom_call.1
$region0: #{tpu_custom_call.1}
  #allocation0 [shape = 'u32[]', space=smem, size = 0x4, offset = 0x4, fixed_abs, tag = 'smem constant byte address 0x4 - core index']
  #allocation1 [shape = 'u32[144,128]{1,0:T(1,128)}', space=vmem, size = 0x12000, scoped, tag = 'internal scratch']
  #allocation2 [shape = 'f32[1,1]{1,0:T(1,128)S(1)}', space=vmem, size = 0x200, scoped, tag = 'scoped memory for tpu_custom_call.1']
  %s0 = inlined_call_operand.vmem [shape: bf16[2,64,128], index: 0, kind: input, shape index: {}]
  %s1 = inlined_call_operand.vmem [shape: bf16[2,32,1], index: 1, kind: input, shape index: {}]
  %s2 = inlined_call_operand.vmem [shape: bf16[128,64], index: 2, kind: input, shape index: {}]
  %s3 = inlined_call_operand.vmem [shape: bf16[128,32], index: 3, kind: input, shape index: {}]
  %s4 = inlined_call_operand.vmem [shape: f32[128,1], index: 4, kind: input, shape index: {}]
  %s5 = inlined_call_operand.vmem [shape: bf16[1,128], index: 5, kind: input, shape index: {}]
  %s6 = inlined_call_operand.<no memory space> [shape: f32[1,1], index: 6, kind: input, shape index: {}]
  %s7 = inlined_call_operand.hbm [shape: f32[2,1,128], index: 7, kind: output, shape index: {}]
  %s8 = sld [smem:[#allocation0]]
  $region61: #{tpu_custom_call.1} parent=0
    _
  %s10 = ssub.s32 1, %s8
  %s11 = scalar_select 0, %s10, %s8
  %v12 = vstv %s6
  %13 = vst [vmem:[#allocation2] sm:$0x1] %v12
  $region1: #{tpu_custom_call.1} parent=0
    #allocation3 [shape = 'u8[1024]{0}', space=vmem, size = 0x400, scoped, tag = 'output window, operand 0']
    #allocation4 [shape = 's32[2]{0}', space=sflag, size = 0x8, scoped, tag = 'scoped memory for tpu_custom_call.1']
    %14 = vsyncpa [#allocation4], 0
    %s15 = scalar_lea.sflag [#allocation4], 1
    %16 = vsyncpa %s15, 0
    loop: start=0, step=1, limit=4
    $region2: #{tpu_custom_call.1} parent=1 // loop_pre_header
      _
    $region3: #{tpu_custom_call.1} parent=1 // loop_header
      %s18 = sphi 0, %s22
      %p19 = scmp.ge.s32.totalorder %s18, 4
      %s25 = sphi 0, %s37
      %s26 = sphi 0, %s33
      %s27 = sphi 0, %s25
      %s28 = sphi 0, %s26
      %s29 = sphi 0, %s27
      %s30 = sphi 0, %s28
      %s42 = sphi 0, %s44
      %s45 = sphi 0, %s42
      %s46 = sphi 0, %s45
      %s62 = sphi 0, %s46
      %s68 = sphi 0, %s70
      %s71 = sphi 0, %s68
      %s72 = sphi 0, %s71
      %s88 = sphi 0, %s72
      %s92 = sphi 0, %s92
      %s94 = sphi 0, %s92
      %s95 = sphi 0, %s94
      %s109 = sphi 0, %s95
      %s113 = sphi 0, %s113
      %s115 = sphi 0, %s113
      %s116 = sphi 0, %s115
      %s130 = sphi 0, %s116
      %s134 = sphi 0, %s134
      %s136 = sphi 0, %s134
      %s137 = sphi 0, %s136
      %s151 = sphi 0, %s137
      %s155 = sphi 0, %s155
      %s157 = sphi 0, %s155
      %s158 = sphi 0, %s157
      %s172 = sphi 0, %s158
      %s176 = sphi 0, %s176
      %s178 = sphi 0, %s176
      %s179 = sphi 0, %s178
      %s193 = sphi 0, %s179
      %s201 = sphi 0, %s203
      %s204 = sphi 0, %s201
      %s205 = sphi 0, %s204
      %s221 = sphi 0, %s205
    $region4: #{tpu_custom_call.1} parent=1 // loop_header_branch
      %21 = sbr.rel (%p19) target = $region8
    $region5: #{tpu_custom_call.1} parent=1 // loop_body
      %s23 = ssub.s32 %s18, 1
      %s24 = ssub.s32 %s18, 2
      %s31 = sadd.s32 1, %s26
      %p32 = scmp.ge.s32.totalorder %s31, 1
      %s33 = scalar_select %p32, 0, %s31
      %s34 = sadd.s32 1, %s25
      %s35 = scalar_select %p32, %s34, %s25
      %p36 = scmp.ge.s32.totalorder %s35, 2
      %s37 = scalar_select %p36, 0, %s35
      %s38 = ssub.s32 %s25, %s37
      %s39 = ssub.s32 %s26, %s33
      %s40 = sor.u32 %s38, %s39
      %p41 = scmp.eq.s32.totalorder %s40, 0
      %s43 = sadd.s32 %s42, 1
      %s44 = scalar_select %p41, %s42, %s43
      %p47 = pneg %p41
      %p48 = scmp.eq.s32.totalorder %s18, 1
      %p49 = por %p47, %p48
      %p50 = scmp.ne.s32.totalorder %s42, %s45
      %p51 = scmp.eq.s32.totalorder %s18, 0
      %p52 = por %p50, %p51
      %p53 = scmp.ne.s32.totalorder %s42, %s45
      %p54 = scmp.eq.s32.totalorder %s23, 1
      %p55 = por %p53, %p54
      %p56 = scmp.ne.s32.totalorder %s45, %s46
      %p57 = scmp.eq.s32.totalorder %s23, 0
      %p58 = por %p56, %p57
      %p59 = scmp.ne.s32.totalorder %s45, %s46
      %p60 = scmp.eq.s32.totalorder %s24, 1
      %p61 = por %p59, %p60
      %p63 = scmp.ne.s32.totalorder %s46, %s62
      %p64 = scmp.eq.s32.totalorder %s24, 0
      %p65 = por %p63, %p64
      %s66 = ssub.s32 %s25, %s37
      %p67 = scmp.eq.s32.totalorder %s66, 0
      %s69 = sadd.s32 %s68, 1
      %s70 = scalar_select %p67, %s68, %s69
      %p73 = pneg %p67
      %p74 = scmp.eq.s32.totalorder %s18, 1
      %p75 = por %p73, %p74
      %p76 = scmp.ne.s32.totalorder %s68, %s71
      %p77 = scmp.eq.s32.totalorder %s18, 0
      %p78 = por %p76, %p77
      %p79 = scmp.ne.s32.totalorder %s68, %s71
      %p80 = scmp.eq.s32.totalorder %s23, 1
      %p81 = por %p79, %p80
      %p82 = scmp.ne.s32.totalorder %s71, %s72
      %p83 = scmp.eq.s32.totalorder %s23, 0
      %p84 = por %p82, %p83
      %p85 = scmp.ne.s32.totalorder %s71, %s72
      %p86 = scmp.eq.s32.totalorder %s24, 1
      %p87 = por %p85, %p86
      %p89 = scmp.ne.s32.totalorder %s72, %s88
      %p90 = scmp.eq.s32.totalorder %s24, 0
      %p91 = por %p89, %p90
      %s93 = sadd.s32 %s92, 1
      %p96 = scmp.eq.s32.totalorder %s18, 1
      %p97 = scmp.ne.s32.totalorder %s92, %s94
      %p98 = scmp.eq.s32.totalorder %s18, 0
      %p99 = por %p97, %p98
      %p100 = scmp.ne.s32.totalorder %s92, %s94
      %p101 = scmp.eq.s32.totalorder %s23, 1
      %p102 = por %p100, %p101
      %p103 = scmp.ne.s32.totalorder %s94, %s95
      %p104 = scmp.eq.s32.totalorder %s23, 0
      %p105 = por %p103, %p104
      %p106 = scmp.ne.s32.totalorder %s94, %s95
      %p107 = scmp.eq.s32.totalorder %s24, 1
      %p108 = por %p106, %p107
      %p110 = scmp.ne.s32.totalorder %s95, %s109
      %p111 = scmp.eq.s32.totalorder %s24, 0
      %p112 = por %p110, %p111
      %s114 = sadd.s32 %s113, 1
      %p117 = scmp.eq.s32.totalorder %s18, 1
      %p118 = scmp.ne.s32.totalorder %s113, %s115
      %p119 = scmp.eq.s32.totalorder %s18, 0
      %p120 = por %p118, %p119
      %p121 = scmp.ne.s32.totalorder %s113, %s115
      %p122 = scmp.eq.s32.totalorder %s23, 1
      %p123 = por %p121, %p122
      %p124 = scmp.ne.s32.totalorder %s115, %s116
      %p125 = scmp.eq.s32.totalorder %s23, 0
      %p126 = por %p124, %p125
      %p127 = scmp.ne.s32.totalorder %s115, %s116
      %p128 = scmp.eq.s32.totalorder %s24, 1
      %p129 = por %p127, %p128
      %p131 = scmp.ne.s32.totalorder %s116, %s130
      %p132 = scmp.eq.s32.totalorder %s24, 0
      %p133 = por %p131, %p132
      %s135 = sadd.s32 %s134, 1
      %p138 = scmp.eq.s32.totalorder %s18, 1
      %p139 = scmp.ne.s32.totalorder %s134, %s136
      %p140 = scmp.eq.s32.totalorder %s18, 0
      %p141 = por %p139, %p140
      %p142 = scmp.ne.s32.totalorder %s134, %s136
      %p143 = scmp.eq.s32.totalorder %s23, 1
      %p144 = por %p142, %p143
      %p145 = scmp.ne.s32.totalorder %s136, %s137
      %p146 = scmp.eq.s32.totalorder %s23, 0
      %p147 = por %p145, %p146
      %p148 = scmp.ne.s32.totalorder %s136, %s137
      %p149 = scmp.eq.s32.totalorder %s24, 1
      %p150 = por %p148, %p149
      %p152 = scmp.ne.s32.totalorder %s137, %s151
      %p153 = scmp.eq.s32.totalorder %s24, 0
      %p154 = por %p152, %p153
      %s156 = sadd.s32 %s155, 1
      %p159 = scmp.eq.s32.totalorder %s18, 1
      %p160 = scmp.ne.s32.totalorder %s155, %s157
      %p161 = scmp.eq.s32.totalorder %s18, 0
      %p162 = por %p160, %p161
      %p163 = scmp.ne.s32.totalorder %s155, %s157
      %p164 = scmp.eq.s32.totalorder %s23, 1
      %p165 = por %p163, %p164
      %p166 = scmp.ne.s32.totalorder %s157, %s158
      %p167 = scmp.eq.s32.totalorder %s23, 0
      %p168 = por %p166, %p167
      %p169 = scmp.ne.s32.totalorder %s157, %s158
      %p170 = scmp.eq.s32.totalorder %s24, 1
      %p171 = por %p169, %p170
      %p173 = scmp.ne.s32.totalorder %s158, %s172
      %p174 = scmp.eq.s32.totalorder %s24, 0
      %p175 = por %p173, %p174
      %s177 = sadd.s32 %s176, 1
      %p180 = scmp.eq.s32.totalorder %s18, 1
      %p181 = scmp.ne.s32.totalorder %s176, %s178
      %p182 = scmp.eq.s32.totalorder %s18, 0
      %p183 = por %p181, %p182
      %p184 = scmp.ne.s32.totalorder %s176, %s178
      %p185 = scmp.eq.s32.totalorder %s23, 1
      %p186 = por %p184, %p185
      %p187 = scmp.ne.s32.totalorder %s178, %s179
      %p188 = scmp.eq.s32.totalorder %s23, 0
      %p189 = por %p187, %p188
      %p190 = scmp.ne.s32.totalorder %s178, %s179
      %p191 = scmp.eq.s32.totalorder %s24, 1
      %p192 = por %p190, %p191
      %p194 = scmp.ne.s32.totalorder %s179, %s193
      %p195 = scmp.eq.s32.totalorder %s24, 0
      %p196 = por %p194, %p195
      %s197 = ssub.s32 %s25, %s37
      %s198 = ssub.s32 %s26, %s33
      %s199 = sor.u32 %s197, %s198
      %p200 = scmp.eq.s32.totalorder %s199, 0
      %s202 = sadd.s32 %s201, 1
      %s203 = scalar_select %p200, %s201, %s202
      %p206 = pneg %p200
      %p207 = scmp.eq.s32.totalorder %s18, 1
      %p208 = por %p206, %p207
      %p209 = scmp.ne.s32.totalorder %s201, %s204
      %p210 = scmp.eq.s32.totalorder %s18, 0
      %p211 = por %p209, %p210
      %p212 = scmp.ne.s32.totalorder %s201, %s204
      %p213 = scmp.eq.s32.totalorder %s23, 1
      %p214 = por %p212, %p213
      %p215 = scmp.ne.s32.totalorder %s204, %s205
      %p216 = scmp.eq.s32.totalorder %s23, 0
      %p217 = por %p215, %p216
      %p218 = scmp.ne.s32.totalorder %s204, %s205
      %p219 = scmp.eq.s32.totalorder %s24, 1
      %p220 = por %p218, %p219
      %p222 = scmp.ne.s32.totalorder %s205, %s221
      %p223 = scmp.eq.s32.totalorder %s24, 0
      %p224 = por %p222, %p223
      %p225 = scmp.le.s32.totalorder 1, %s18
      %p226 = scmp.lt.s32.totalorder %s18, 3
      %p227 = pnand %p225, %p226
      %p228 = pneg %p227
      // Predicated region
      $region9: #{tpu_custom_call.1} parent=5 // pred_check
        _
      $region10: #{tpu_custom_call.1} parent=5 // pred_check_branch
        %230 = sbr.rel (%p227) target = $region12
      $region11: #{tpu_custom_call.1} parent=5 // pred_region
        %s231 = ssub.s32 %s18, 1
        // Predicated region
        $region13: #{tpu_custom_call.1} parent=11 // pred_check
          %p232 = pneg %p105
        $region14: #{tpu_custom_call.1} parent=11 // pred_check_branch
          %234 = sbr.rel (%p232) target = $region16
        $region15: #{tpu_custom_call.1} parent=11 // pred_region
          _
        $region16: #{tpu_custom_call.1} parent=11 // pred_fallthru
          _
        // Predicated region
        $region17: #{tpu_custom_call.1} parent=11 // pred_check
          %p235 = pneg %p126
        $region18: #{tpu_custom_call.1} parent=11 // pred_check_branch
          %237 = sbr.rel (%p235) target = $region20
        $region19: #{tpu_custom_call.1} parent=11 // pred_region
          _
        $region20: #{tpu_custom_call.1} parent=11 // pred_fallthru
          _
        // Predicated region
        $region21: #{tpu_custom_call.1} parent=11 // pred_check
          %p238 = pneg %p147
        $region22: #{tpu_custom_call.1} parent=11 // pred_check_branch
          %240 = sbr.rel (%p238) target = $region24
        $region23: #{tpu_custom_call.1} parent=11 // pred_region
          _
        $region24: #{tpu_custom_call.1} parent=11 // pred_fallthru
          _
        // Predicated region
        $region25: #{tpu_custom_call.1} parent=11 // pred_check
          %p241 = pneg %p168
        $region26: #{tpu_custom_call.1} parent=11 // pred_check_branch
          %243 = sbr.rel (%p241) target = $region28
        $region27: #{tpu_custom_call.1} parent=11 // pred_region
          _
        $region28: #{tpu_custom_call.1} parent=11 // pred_fallthru
          _
        // Predicated region
        $region29: #{tpu_custom_call.1} parent=11 // pred_check
          %p244 = pneg %p189
        $region30: #{tpu_custom_call.1} parent=11 // pred_check_branch
          %246 = sbr.rel (%p244) target = $region32
        $region31: #{tpu_custom_call.1} parent=11 // pred_region
          _
        $region32: #{tpu_custom_call.1} parent=11 // pred_fallthru
          _
      $region12: #{tpu_custom_call.1} parent=5 // pred_fallthru
        _
      %p247 = scmp.lt.s32.totalorder %s18, 2
      // Predicated region
      $region33: #{tpu_custom_call.1} parent=5 // pred_check
        %p248 = pneg %p247
      $region34: #{tpu_custom_call.1} parent=5 // pred_check_branch
        %250 = sbr.rel (%p248) target = $region36
      $region35: #{tpu_custom_call.1} parent=5 // pred_region
        // Predicated region
        $region37: #{tpu_custom_call.1} parent=35 // pred_check
          %p251 = pneg %p52
        $region38: #{tpu_custom_call.1} parent=35 // pred_check_branch
          %253 = sbr.rel (%p251) target = $region40
        $region39: #{tpu_custom_call.1} parent=35 // pred_region
          %p254 = scmp.lt.s32.totalorder %s25, 1
          %s255 = scalar_select %p254, %s25, 1
          %p256 = scmp.lt.s32.totalorder %s26, 0
          %s257 = scalar_select %p256, %s26, 0
          %s258 = smul.addr %s255, 8
          %s259 = sadd.s32 %s257, %s258
          %s260 = smul.addr %s259, 4
          %s261 = scalar_lea.vmem %s0, %s260
        $region40: #{tpu_custom_call.1} parent=35 // pred_fallthru
          _
        // Predicated region
        $region41: #{tpu_custom_call.1} parent=35 // pred_check
          %p262 = pneg %p78
        $region42: #{tpu_custom_call.1} parent=35 // pred_check_branch
          %264 = sbr.rel (%p262) target = $region44
        $region43: #{tpu_custom_call.1} parent=35 // pred_region
          %p265 = scmp.lt.s32.totalorder %s25, 1
          %s266 = scalar_select %p265, %s25, 1
          %s267 = smul.addr %s266, 4
          %s268 = smul.addr %s267, 4
          %s269 = scalar_lea.vmem %s1, %s268
        $region44: #{tpu_custom_call.1} parent=35 // pred_fallthru
          _
      $region36: #{tpu_custom_call.1} parent=5 // pred_fallthru
        _
      %p270 = scmp.le.s32.totalorder 1, %s18
      %p271 = scmp.lt.s32.totalorder %s18, 3
      %p272 = pnand %p270, %p271
      %p273 = pneg %p272
      // Predicated region
      $region45: #{tpu_custom_call.1} parent=5 // pred_check
        _
      $region46: #{tpu_custom_call.1} parent=5 // pred_check_branch
        %275 = sbr.rel (%p272) target = $region48
      $region47: #{tpu_custom_call.1} parent=5 // pred_region
        %s276 = ssub.s32 %s18, 1
        %p277 = scmp.lt.s32.totalorder %s27, 1
        %s278 = scalar_select %p277, %s27, 1
        %p279 = scmp.lt.s32.totalorder %s28, 0
        %s280 = scalar_select %p279, %s28, 0
        %s281 = smul.addr %s278, 8
        %s282 = sadd.s32 %s280, %s281
        %s283 = smul.addr %s282, 4
        %s284 = scalar_lea.vmem %s0, %s283
        %p285 = pneg %p58
        %p286 = pneg %p55
        %p287 = scmp.lt.s32.totalorder %s27, 1
        %s288 = scalar_select %p287, %s27, 1
        %s289 = smul.addr %s288, 4
        %s290 = smul.addr %s289, 4
        %s291 = scalar_lea.vmem %s1, %s290
        %p292 = pneg %p84
        %p293 = pneg %p81
        %p294 = pneg %p105
        %p295 = pneg %p102
        %p296 = pneg %p126
        %p297 = pneg %p123
        %p298 = pneg %p147
        %p299 = pneg %p144
        %p300 = pneg %p168
        %p301 = pneg %p165
        %p302 = pneg %p189
        %p303 = pneg %p186
        %p304 = pneg %p217
        %p305 = pneg %p214
        %s306 = sand.u32 %s204, 1
        %s307 = scalar_lea.sflag [#allocation4], %s306
        %s308 = sand.u32 %s204, 1
        %s309 = scalar_lea.vmem [#allocation3], %s308
        %p310 = scmp.lt.s32.totalorder %s27, 1
        %s311 = scalar_select %p310, %s27, 1
        %p312 = scmp.lt.s32.totalorder %s28, 0
        %s313 = scalar_select %p312, %s28, 0
        %s314 = smul.addr %s311, 8
        %s315 = sadd.s32 %s313, %s314
        %s316 = smul.addr %s315, 4
        %s317 = scalar_lea.vmem %s0, %s316
        %p318 = scmp.lt.s32.totalorder %s27, 1
        %s319 = scalar_select %p318, %s27, 1
        %s320 = smul.addr %s319, 4
        %s321 = smul.addr %s320, 4
        %s322 = scalar_lea.vmem %s1, %s321
        %v324 = vld [vmem:[%s317] sm:$0xf]
        %v325 = vld [vmem:[%s317 + $0x4] sm:$0xf]
        %v326 = vld [vmem:[%s317 + $0x8] sm:$0xf]
        %v327 = vld [vmem:[%s317 + $0xc] sm:$0xf]
        %v328 = vld [vmem:[%s317 + $0x10] sm:$0xf]
        %v329 = vld [vmem:[%s317 + $0x14] sm:$0xf]
        %v330 = vld [vmem:[%s317 + $0x18] sm:$0xf]
        %v331 = vld [vmem:[%s317 + $0x1c] sm:$0xf]
        %v332 = vld [vmem:[%s322] sm:$0xf]
        %v333 = vld [vmem:[%s322 + $0x4] sm:$0xf]
        %v334 = vld [vmem:[%s322 + $0x8] sm:$0xf]
        %v335 = vld [vmem:[%s322 + $0xc] sm:$0xf]
        %v336 = vld [vmem:[%s2] sm:$0xf]
        %v337 = vld [vmem:[%s2 + $0x4] sm:$0xf]
        %v338 = vld [vmem:[%s2 + $0x8] sm:$0xf]
        %v339 = vld [vmem:[%s2 + $0xc] sm:$0xf]
        %v340 = vld [vmem:[%s2 + $0x10] sm:$0xf]
        %v341 = vld [vmem:[%s2 + $0x14] sm:$0xf]
        %v342 = vld [vmem:[%s2 + $0x18] sm:$0xf]
        %v343 = vld [vmem:[%s2 + $0x1c] sm:$0xf]
        %v344 = vld [vmem:[%s2 + $0x20] sm:$0xf]
        %v345 = vld [vmem:[%s2 + $0x24] sm:$0xf]
        %v346 = vld [vmem:[%s2 + $0x28] sm:$0xf]
        %v347 = vld [vmem:[%s2 + $0x2c] sm:$0xf]
        %v348 = vld [vmem:[%s2 + $0x30] sm:$0xf]
        %v349 = vld [vmem:[%s2 + $0x34] sm:$0xf]
        %v350 = vld [vmem:[%s2 + $0x38] sm:$0xf]
        %v351 = vld [vmem:[%s2 + $0x3c] sm:$0xf]
        %v352 = vld [vmem:[%s3] sm:$0xf]
        %v353 = vld [vmem:[%s3 + $0x4] sm:$0xf]
        %v354 = vld [vmem:[%s3 + $0x8] sm:$0xf]
        %v355 = vld [vmem:[%s3 + $0xc] sm:$0xf]
        %v356 = vld [vmem:[%s3 + $0x10] sm:$0xf]
        %v357 = vld [vmem:[%s3 + $0x14] sm:$0xf]
        %v358 = vld [vmem:[%s3 + $0x18] sm:$0xf]
        %v359 = vld [vmem:[%s3 + $0x1c] sm:$0xf]
        %v360 = vld [vmem:[%s3 + $0x20] sm:$0xf]
        %v361 = vld [vmem:[%s3 + $0x24] sm:$0xf]
        %v362 = vld [vmem:[%s3 + $0x28] sm:$0xf]
        %v363 = vld [vmem:[%s3 + $0x2c] sm:$0xf]
        %v364 = vld [vmem:[%s3 + $0x30] sm:$0xf]
        %v365 = vld [vmem:[%s3 + $0x34] sm:$0xf]
        %v366 = vld [vmem:[%s3 + $0x38] sm:$0xf]
        %v367 = vld [vmem:[%s3 + $0x3c] sm:$0xf]
        %v384 = vunpack.c.l.b16 %v352
        %v385 = vunpack.c.l.b16 %v353
        %v386 = vunpack.c.l.b16 %v354
        %v387 = vunpack.c.l.b16 %v355
        %v388 = vunpack.c.l.b16 %v356
        %v389 = vunpack.c.l.b16 %v357
        %v390 = vunpack.c.l.b16 %v358
        %v391 = vunpack.c.l.b16 %v359
        %v392 = vunpack.c.l.b16 %v360
        %v393 = vunpack.c.l.b16 %v361
        %v394 = vunpack.c.l.b16 %v362
        %v395 = vunpack.c.l.b16 %v363
        %v396 = vunpack.c.l.b16 %v364
        %v397 = vunpack.c.l.b16 %v365
        %v398 = vunpack.c.l.b16 %v366
        %v399 = vunpack.c.l.b16 %v367
        %v400 = vpack.c.b16 %v385, %v384
        %v401 = vpack.c.b16 %v387, %v386
        %v402 = vpack.c.b16 %v389, %v388
        %v403 = vpack.c.b16 %v391, %v390
        %v404 = vpack.c.b16 %v393, %v392
        %v405 = vpack.c.b16 %v395, %v394
        %v406 = vpack.c.b16 %v397, %v396
        %v407 = vpack.c.b16 %v399, %v398
        %v412 = vunpack.c.l.b16 %v332
        %v413 = vunpack.c.l.b16 %v333
        %v414 = vunpack.c.l.b16 %v334
        %v415 = vunpack.c.l.b16 %v335
        %v416 = vpack.c.b16 %v413, %v412
        %v417 = vpack.c.b16 %v415, %v414
        %vm420 = vcmask 261120
        %v422 = vsel %vm420, %v400, 0
        %v425 = vsel %vm420, %v401, 0
        %v428 = vsel %vm420, %v402, 0
        %v431 = vsel %vm420, %v403, 0
        %v434 = vsel %vm420, %v404, 0
        %v437 = vsel %vm420, %v405, 0
        %v440 = vsel %vm420, %v406, 0
        %v443 = vsel %vm420, %v407, 0
        %445 = vmatprep.subr.bf16.mxu0 0
        %446 = vmatpush1.bf16.msra.mxu0 %v416
        %447 = vmatprep.subr.bf16.mxu0 0
        %448 = vmatpush1.bf16.msra.mxu0 %v417
        %449 = vmatprep.subr.bf16.mxu0 0
        %450 = vmatpush1.bf16.msra.mxu0 0
        %451 = vmatprep.subr.bf16.mxu0 0
        %452 = vmatpush1.bf16.msra.mxu0 0
        %453 = vmatprep.subr.bf16.mxu0 0
        %454 = vmatpush1.bf16.msra.mxu0 0
        %455 = vmatprep.subr.bf16.mxu0 0
        %456 = vmatpush1.bf16.msra.mxu0 0
        %457 = vmatprep.subr.bf16.mxu0 0
        %458 = vmatpush1.bf16.msra.mxu0 0
        %459 = vmatprep.subr.bf16.mxu0 0
        %460 = vmatpush1.bf16.msra.mxu0 0
        %461 = vmatprep.subr.bf16.mxu0 0
        %462 = vmatpush1.bf16.msra.mxu0 0
        %463 = vmatprep.subr.bf16.mxu0 0
        %464 = vmatpush1.bf16.msra.mxu0 0
        %465 = vmatprep.subr.bf16.mxu0 0
        %466 = vmatpush1.bf16.msra.mxu0 0
        %467 = vmatprep.subr.bf16.mxu0 0
        %468 = vmatpush1.bf16.msra.mxu0 0
        %469 = vmatprep.subr.bf16.mxu0 0
        %470 = vmatpush1.bf16.msra.mxu0 0
        %471 = vmatprep.subr.bf16.mxu0 0
        %472 = vmatpush1.bf16.msra.mxu0 0
        %473 = vmatprep.subr.bf16.mxu0 0
        %474 = vmatpush1.bf16.msra.mxu0 0
        %475 = vmatprep.subr.bf16.mxu0 0
        %476 = vmatpush1.bf16.msra.mxu0 0
        %477 = vmatprep.mubr.bf16.mxu0 0
        %478 = vmatmul.mubr.bf16.gmra.mrb[0].mxu0 %v422
        %v479 = vpop.f32.mrb[0].mxu0
        %v480 = vadd.f32 0.0, %v479
        %v481 = vpop.f32.mrb[0].mxu0
        %v482 = vpop.f32.mrb[0].mxu0
        %v483 = vadd.f32 0.0, %v482
        %v484 = vpop.f32.mrb[0].mxu0
        %485 = vmatprep.mubr.bf16.mxu0 0
        %486 = vmatmul.mubr.bf16.gmra.mrb[0].mxu0 %v425
        %v487 = vpop.f32.mrb[0].mxu0
        %v488 = vadd.f32 0.0, %v487
        %v489 = vpop.f32.mrb[0].mxu0
        %v490 = vpop.f32.mrb[0].mxu0
        %v491 = vadd.f32 0.0, %v490
        %v492 = vpop.f32.mrb[0].mxu0
        %493 = vmatprep.mubr.bf16.mxu0 0
        %494 = vmatmul.mubr.bf16.gmra.mrb[0].mxu0 %v428
        %v495 = vpop.f32.mrb[0].mxu0
        %v496 = vadd.f32 0.0, %v495
        %v497 = vpop.f32.mrb[0].mxu0
        %v498 = vpop.f32.mrb[0].mxu0
        %v499 = vadd.f32 0.0, %v498
        %v500 = vpop.f32.mrb[0].mxu0
        %501 = vmatprep.mubr.bf16.mxu0 0
        %502 = vmatmul.mubr.bf16.gmra.mrb[0].mxu0 %v431
        %v503 = vpop.f32.mrb[0].mxu0
        %v504 = vadd.f32 0.0, %v503
        %v505 = vpop.f32.mrb[0].mxu0
        %v506 = vpop.f32.mrb[0].mxu0
        %v507 = vadd.f32 0.0, %v506
        %v508 = vpop.f32.mrb[0].mxu0
        %509 = vmatprep.mubr.bf16.mxu0 0
        %510 = vmatmul.mubr.bf16.gmra.mrb[0].mxu0 %v434
        %v511 = vpop.f32.mrb[0].mxu0
        %v512 = vadd.f32 0.0, %v511
        %v513 = vpop.f32.mrb[0].mxu0
        %v514 = vpop.f32.mrb[0].mxu0
        %v515 = vadd.f32 0.0, %v514
        %v516 = vpop.f32.mrb[0].mxu0
        %517 = vmatprep.mubr.bf16.mxu0 0
        %518 = vmatmul.mubr.bf16.gmra.mrb[0].mxu0 %v437
        %v519 = vpop.f32.mrb[0].mxu0
        %v520 = vadd.f32 0.0, %v519
        %v521 = vpop.f32.mrb[0].mxu0
        %v522 = vpop.f32.mrb[0].mxu0
        %v523 = vadd.f32 0.0, %v522
        %v524 = vpop.f32.mrb[0].mxu0
        %525 = vmatprep.mubr.bf16.mxu0 0
        %526 = vmatmul.mubr.bf16.gmra.mrb[0].mxu0 %v440
        %v527 = vpop.f32.mrb[0].mxu0
        %v528 = vadd.f32 0.0, %v527
        %v529 = vpop.f32.mrb[0].mxu0
        %v530 = vpop.f32.mrb[0].mxu0
        %v531 = vadd.f32 0.0, %v530
        %v532 = vpop.f32.mrb[0].mxu0
        %533 = vmatprep.mubr.bf16.mxu0 0
        %534 = vmatmul.mubr.bf16.gmra.mrb[0].mxu0 %v443
        %v535 = vpop.f32.mrb[0].mxu0
        %v536 = vadd.f32 0.0, %v535
        %v537 = vpop.f32.mrb[0].mxu0
        %v538 = vpop.f32.mrb[0].mxu0
        %v539 = vadd.f32 0.0, %v538
        %v540 = vpop.f32.mrb[0].mxu0
        %541 = vdwg.mxu0
        %543 = vset.pattern.permute.xlu0 0
        %544 = vperm.xlu0 %543, %v480
        %v545 = vpop.permute.xlu0 %544
        %548 = vset.pattern.permute.xlu0 0
        %549 = vperm.xlu0 %548, %v483
        %v550 = vpop.permute.xlu0 %549
        %553 = vset.pattern.permute.xlu0 0
        %554 = vperm.xlu0 %553, %v488
        %v555 = vpop.permute.xlu0 %554
        %558 = vset.pattern.permute.xlu0 0
        %559 = vperm.xlu0 %558, %v491
        %v560 = vpop.permute.xlu0 %559
        %563 = vset.pattern.permute.xlu0 0
        %564 = vperm.xlu0 %563, %v496
        %v565 = vpop.permute.xlu0 %564
        %568 = vset.pattern.permute.xlu0 0
        %569 = vperm.xlu0 %568, %v499
        %v570 = vpop.permute.xlu0 %569
        %573 = vset.pattern.permute.xlu0 0
        %574 = vperm.xlu0 %573, %v504
        %v575 = vpop.permute.xlu0 %574
        %578 = vset.pattern.permute.xlu0 0
        %579 = vperm.xlu0 %578, %v507
        %v580 = vpop.permute.xlu0 %579
        %583 = vset.pattern.permute.xlu0 0
        %584 = vperm.xlu0 %583, %v512
        %v585 = vpop.permute.xlu0 %584
        %588 = vset.pattern.permute.xlu0 0
        %589 = vperm.xlu0 %588, %v515
        %v590 = vpop.permute.xlu0 %589
        %593 = vset.pattern.permute.xlu0 0
        %594 = vperm.xlu0 %593, %v520
        %v595 = vpop.permute.xlu0 %594
        %598 = vset.pattern.permute.xlu0 0
        %599 = vperm.xlu0 %598, %v523
        %v600 = vpop.permute.xlu0 %599
        %603 = vset.pattern.permute.xlu0 0
        %604 = vperm.xlu0 %603, %v528
        %v605 = vpop.permute.xlu0 %604
        %608 = vset.pattern.permute.xlu0 0
        %609 = vperm.xlu0 %608, %v531
        %v610 = vpop.permute.xlu0 %609
        %613 = vset.pattern.permute.xlu0 0
        %614 = vperm.xlu0 %613, %v536
        %v615 = vpop.permute.xlu0 %614
        %618 = vset.pattern.permute.xlu0 0
        %619 = vperm.xlu0 %618, %v539
        %v620 = vpop.permute.xlu0 %619
        %v638 = vunpack.c.l.b16 %v336
        %v639 = vunpack.c.l.b16 %v337
        %v640 = vunpack.c.l.b16 %v338
        %v641 = vunpack.c.l.b16 %v339
        %v642 = vunpack.c.l.b16 %v340
        %v643 = vunpack.c.l.b16 %v341
        %v644 = vunpack.c.l.b16 %v342
        %v645 = vunpack.c.l.b16 %v343
        %v646 = vunpack.c.l.b16 %v344
        %v647 = vunpack.c.l.b16 %v345
        %v648 = vunpack.c.l.b16 %v346
        %v649 = vunpack.c.l.b16 %v347
        %v650 = vunpack.c.l.b16 %v348
        %v651 = vunpack.c.l.b16 %v349
        %v652 = vunpack.c.l.b16 %v350
        %v653 = vunpack.c.l.b16 %v351
        %v654 = vpack.c.b16 %v639, %v638
        %v655 = vpack.c.b16 %v641, %v640
        %v656 = vpack.c.b16 %v643, %v642
        %v657 = vpack.c.b16 %v645, %v644
        %v658 = vpack.c.b16 %v647, %v646
        %v659 = vpack.c.b16 %v649, %v648
        %v660 = vpack.c.b16 %v651, %v650
        %v661 = vpack.c.b16 %v653, %v652
        %v670 = vunpack.c.l.b16 %v324
        %v671 = vunpack.c.l.b16 %v325
        %v672 = vunpack.c.l.b16 %v326
        %v673 = vunpack.c.l.b16 %v327
        %v674 = vunpack.c.l.b16 %v328
        %v675 = vunpack.c.l.b16 %v329
        %v676 = vunpack.c.l.b16 %v330
        %v677 = vunpack.c.l.b16 %v331
        %v678 = vpack.c.b16 %v671, %v670
        %v679 = vpack.c.b16 %v673, %v672
        %v680 = vpack.c.b16 %v675, %v674
        %v681 = vpack.c.b16 %v677, %v676
        %vm686 = vcmask 523264
        %v688 = vsel %vm686, %v654, 0
        %v691 = vsel %vm686, %v655, 0
        %v694 = vsel %vm686, %v656, 0
        %v697 = vsel %vm686, %v657, 0
        %v700 = vsel %vm686, %v658, 0
        %v703 = vsel %vm686, %v659, 0
        %v706 = vsel %vm686, %v660, 0
        %v709 = vsel %vm686, %v661, 0
        %711 = vmatprep.subr.bf16.mxu0 0
        %712 = vmatpush1.bf16.msra.mxu0 %v678
        %713 = vmatprep.subr.bf16.mxu0 0
        %714 = vmatpush1.bf16.msra.mxu0 %v679
        %715 = vmatprep.subr.bf16.mxu0 0
        %716 = vmatpush1.bf16.msra.mxu0 %v680
        %717 = vmatprep.subr.bf16.mxu0 0
        %718 = vmatpush1.bf16.msra.mxu0 %v681
        %719 = vmatprep.subr.bf16.mxu0 0
        %720 = vmatpush1.bf16.msra.mxu0 0
        %721 = vmatprep.subr.bf16.mxu0 0
        %722 = vmatpush1.bf16.msra.mxu0 0
        %723 = vmatprep.subr.bf16.mxu0 0
        %724 = vmatpush1.bf16.msra.mxu0 0
        %725 = vmatprep.subr.bf16.mxu0 0
        %726 = vmatpush1.bf16.msra.mxu0 0
        %727 = vmatprep.subr.bf16.mxu0 0
        %728 = vmatpush1.bf16.msra.mxu0 0
        %729 = vmatprep.subr.bf16.mxu0 0
        %730 = vmatpush1.bf16.msra.mxu0 0
        %731 = vmatprep.subr.bf16.mxu0 0
        %732 = vmatpush1.bf16.msra.mxu0 0
        %733 = vmatprep.subr.bf16.mxu0 0
        %734 = vmatpush1.bf16.msra.mxu0 0
        %735 = vmatprep.subr.bf16.mxu0 0
        %736 = vmatpush1.bf16.msra.mxu0 0
        %737 = vmatprep.subr.bf16.mxu0 0
        %738 = vmatpush1.bf16.msra.mxu0 0
        %739 = vmatprep.subr.bf16.mxu0 0
        %740 = vmatpush1.bf16.msra.mxu0 0
        %741 = vmatprep.subr.bf16.mxu0 0
        %742 = vmatpush1.bf16.msra.mxu0 0
        %743 = vmatprep.mubr.bf16.mxu0 0
        %744 = vmatmul.mubr.bf16.gmra.mrb[0].mxu0 %v688
        %v745 = vpop.f32.mrb[0].mxu0
        %v746 = vadd.f32 %v545, %v745
        %v747 = vpop.f32.mrb[0].mxu0
        %v748 = vpop.f32.mrb[0].mxu0
        %v749 = vadd.f32 %v550, %v748
        %v750 = vpop.f32.mrb[0].mxu0
        %751 = vmatprep.mubr.bf16.mxu0 0
        %752 = vmatmul.mubr.bf16.gmra.mrb[0].mxu0 %v691
        %v753 = vpop.f32.mrb[0].mxu0
        %v754 = vadd.f32 %v555, %v753
        %v755 = vpop.f32.mrb[0].mxu0
        %v756 = vpop.f32.mrb[0].mxu0
        %v757 = vadd.f32 %v560, %v756
        %v758 = vpop.f32.mrb[0].mxu0
        %759 = vmatprep.mubr.bf16.mxu0 0
        %760 = vmatmul.mubr.bf16.gmra.mrb[0].mxu0 %v694
        %v761 = vpop.f32.mrb[0].mxu0
        %v762 = vadd.f32 %v565, %v761
        %v763 = vpop.f32.mrb[0].mxu0
        %v764 = vpop.f32.mrb[0].mxu0
        %v765 = vadd.f32 %v570, %v764
        %v766 = vpop.f32.mrb[0].mxu0
        %767 = vmatprep.mubr.bf16.mxu0 0
        %768 = vmatmul.mubr.bf16.gmra.mrb[0].mxu0 %v697
        %v769 = vpop.f32.mrb[0].mxu0
        %v770 = vadd.f32 %v575, %v769
        %v771 = vpop.f32.mrb[0].mxu0
        %v772 = vpop.f32.mrb[0].mxu0
        %v773 = vadd.f32 %v580, %v772
        %v774 = vpop.f32.mrb[0].mxu0
        %775 = vmatprep.mubr.bf16.mxu0 0
        %776 = vmatmul.mubr.bf16.gmra.mrb[0].mxu0 %v700
        %v777 = vpop.f32.mrb[0].mxu0
        %v778 = vadd.f32 %v585, %v777
        %v779 = vpop.f32.mrb[0].mxu0
        %v780 = vpop.f32.mrb[0].mxu0
        %v781 = vadd.f32 %v590, %v780
        %v782 = vpop.f32.mrb[0].mxu0
        %783 = vmatprep.mubr.bf16.mxu0 0
        %784 = vmatmul.mubr.bf16.gmra.mrb[0].mxu0 %v703
        %v785 = vpop.f32.mrb[0].mxu0
        %v786 = vadd.f32 %v595, %v785
        %v787 = vpop.f32.mrb[0].mxu0
        %v788 = vpop.f32.mrb[0].mxu0
        %v789 = vadd.f32 %v600, %v788
        %v790 = vpop.f32.mrb[0].mxu0
        %791 = vmatprep.mubr.bf16.mxu0 0
        %792 = vmatmul.mubr.bf16.gmra.mrb[0].mxu0 %v706
        %v793 = vpop.f32.mrb[0].mxu0
        %v794 = vadd.f32 %v605, %v793
        %v795 = vpop.f32.mrb[0].mxu0
        %v796 = vpop.f32.mrb[0].mxu0
        %v797 = vadd.f32 %v610, %v796
        %v798 = vpop.f32.mrb[0].mxu0
        %799 = vmatprep.mubr.bf16.mxu0 0
        %800 = vmatmul.mubr.bf16.gmra.mrb[0].mxu0 %v709
        %v801 = vpop.f32.mrb[0].mxu0
        %v802 = vadd.f32 %v615, %v801
        %v803 = vpop.f32.mrb[0].mxu0
        %v804 = vpop.f32.mrb[0].mxu0
        %v805 = vadd.f32 %v620, %v804
        %v806 = vpop.f32.mrb[0].mxu0
        %807 = vdwg.mxu0
        %v808 = vld [vmem:[%s4] sm:$0xff]
        %v809 = vld [vmem:[%s4 + $0x8] sm:$0xff]
        %v810 = vld [vmem:[%s4 + $0x10] sm:$0xff]
        %v811 = vld [vmem:[%s4 + $0x18] sm:$0xff]
        %v812 = vld [vmem:[%s4 + $0x20] sm:$0xff]
        %v813 = vld [vmem:[%s4 + $0x28] sm:$0xff]
        %v814 = vld [vmem:[%s4 + $0x30] sm:$0xff]
        %v815 = vld [vmem:[%s4 + $0x38] sm:$0xff]
        %v816 = vld [vmem:[%s4 + $0x40] sm:$0xff]
        %v817 = vld [vmem:[%s4 + $0x48] sm:$0xff]
        %v818 = vld [vmem:[%s4 + $0x50] sm:$0xff]
        %v819 = vld [vmem:[%s4 + $0x58] sm:$0xff]
        %v820 = vld [vmem:[%s4 + $0x60] sm:$0xff]
        %v821 = vld [vmem:[%s4 + $0x68] sm:$0xff]
        %v822 = vld [vmem:[%s4 + $0x70] sm:$0xff]
        %v823 = vld [vmem:[%s4 + $0x78] sm:$0xff]
        %825 = vset.pattern.permute.xlu0 0
        %826 = vperm.xlu0 %825, %v808
        %v827 = vpop.permute.xlu0 %826
        %830 = vset.pattern.permute.xlu0 0
        %831 = vperm.xlu0 %830, %v809
        %v832 = vpop.permute.xlu0 %831
        %835 = vset.pattern.permute.xlu0 0
        %836 = vperm.xlu0 %835, %v810
        %v837 = vpop.permute.xlu0 %836
        %840 = vset.pattern.permute.xlu0 0
        %841 = vperm.xlu0 %840, %v811
        %v842 = vpop.permute.xlu0 %841
        %845 = vset.pattern.permute.xlu0 0
        %846 = vperm.xlu0 %845, %v812
        %v847 = vpop.permute.xlu0 %846
        %850 = vset.pattern.permute.xlu0 0
        %851 = vperm.xlu0 %850, %v813
        %v852 = vpop.permute.xlu0 %851
        %855 = vset.pattern.permute.xlu0 0
        %856 = vperm.xlu0 %855, %v814
        %v857 = vpop.permute.xlu0 %856
        %860 = vset.pattern.permute.xlu0 0
        %861 = vperm.xlu0 %860, %v815
        %v862 = vpop.permute.xlu0 %861
        %865 = vset.pattern.permute.xlu0 0
        %866 = vperm.xlu0 %865, %v816
        %v867 = vpop.permute.xlu0 %866
        %870 = vset.pattern.permute.xlu0 0
        %871 = vperm.xlu0 %870, %v817
        %v872 = vpop.permute.xlu0 %871
        %875 = vset.pattern.permute.xlu0 0
        %876 = vperm.xlu0 %875, %v818
        %v877 = vpop.permute.xlu0 %876
        %880 = vset.pattern.permute.xlu0 0
        %881 = vperm.xlu0 %880, %v819
        %v882 = vpop.permute.xlu0 %881
        %885 = vset.pattern.permute.xlu0 0
        %886 = vperm.xlu0 %885, %v820
        %v887 = vpop.permute.xlu0 %886
        %890 = vset.pattern.permute.xlu0 0
        %891 = vperm.xlu0 %890, %v821
        %v892 = vpop.permute.xlu0 %891
        %895 = vset.pattern.permute.xlu0 0
        %896 = vperm.xlu0 %895, %v822
        %v897 = vpop.permute.xlu0 %896
        %900 = vset.pattern.permute.xlu0 0
        %901 = vperm.xlu0 %900, %v823
        %v902 = vpop.permute.xlu0 %901
        %v904 = vadd.f32 %v746, %v827
        %v905 = vadd.f32 %v749, %v832
        %v906 = vadd.f32 %v754, %v837
        %v907 = vadd.f32 %v757, %v842
        %v908 = vadd.f32 %v762, %v847
        %v909 = vadd.f32 %v765, %v852
        %v910 = vadd.f32 %v770, %v857
        %v911 = vadd.f32 %v773, %v862
        %v912 = vadd.f32 %v778, %v867
        %v913 = vadd.f32 %v781, %v872
        %v914 = vadd.f32 %v786, %v877
        %v915 = vadd.f32 %v789, %v882
        %v916 = vadd.f32 %v794, %v887
        %v917 = vadd.f32 %v797, %v892
        %v918 = vadd.f32 %v802, %v897
        %v919 = vadd.f32 %v805, %v902
        %v920 = vmax.f32 %v904, 0.0
        %v921 = vmax.f32 %v905, 0.0
        %v922 = vmax.f32 %v906, 0.0
        %v923 = vmax.f32 %v907, 0.0
        %v924 = vmax.f32 %v908, 0.0
        %v925 = vmax.f32 %v909, 0.0
        %v926 = vmax.f32 %v910, 0.0
        %v927 = vmax.f32 %v911, 0.0
        %v928 = vmax.f32 %v912, 0.0
        %v929 = vmax.f32 %v913, 0.0
        %v930 = vmax.f32 %v914, 0.0
        %v931 = vmax.f32 %v915, 0.0
        %v932 = vmax.f32 %v916, 0.0
        %v933 = vmax.f32 %v917, 0.0
        %v934 = vmax.f32 %v918, 0.0
        %v935 = vmax.f32 %v919, 0.0
        %v936 = vld [vmem:[%s5] sm:$0x1]
        %v937 = vld [vmem:[#allocation2] sm:$0x1]
        %v938 = vpack.c.bf16 %v921, %v920
        %v939 = vpack.c.bf16 %v923, %v922
        %v940 = vpack.c.bf16 %v925, %v924
        %v941 = vpack.c.bf16 %v927, %v926
        %v942 = vpack.c.bf16 %v929, %v928
        %v943 = vpack.c.bf16 %v931, %v930
        %v944 = vpack.c.bf16 %v933, %v932
        %v945 = vpack.c.bf16 %v935, %v934
        %947 = vset.pattern.permute.xlu0 0
        %948 = vperm.xlu0 %947, %v937
        %v949 = vpop.permute.xlu0 %948
        %v951 = vlaneseq
        %v952 = vshrl.u32 %v951, 7
        %v953 = vsub.s32 0, %v952
        %v954 = vrot.slane %v949, %v953
        %955 = vmatprep.subr.bf16.mxu0 0
        %956 = vmatpush1.bf16.msra.mxu0 %v938
        %957 = vmatprep.subr.bf16.mxu0 0
        %958 = vmatpush1.bf16.msra.mxu0 %v939
        %959 = vmatprep.subr.bf16.mxu0 0
        %960 = vmatpush1.bf16.msra.mxu0 %v940
        %961 = vmatprep.subr.bf16.mxu0 0
        %962 = vmatpush1.bf16.msra.mxu0 %v941
        %963 = vmatprep.subr.bf16.mxu0 0
        %964 = vmatpush1.bf16.msra.mxu0 %v942
        %965 = vmatprep.subr.bf16.mxu0 0
        %966 = vmatpush1.bf16.msra.mxu0 %v943
        %967 = vmatprep.subr.bf16.mxu0 0
        %968 = vmatpush1.bf16.msra.mxu0 %v944
        %969 = vmatprep.subr.bf16.mxu0 0
        %970 = vmatpush1.bf16.msra.mxu0 %v945
        %971 = vmatprep.subr.bf16.mxu0 0
        %972 = vmatpush1.bf16.msra.mxu0 0
        %973 = vmatprep.subr.bf16.mxu0 0
        %974 = vmatpush1.bf16.msra.mxu0 0
        %975 = vmatprep.subr.bf16.mxu0 0
        %976 = vmatpush1.bf16.msra.mxu0 0
        %977 = vmatprep.subr.bf16.mxu0 0
        %978 = vmatpush1.bf16.msra.mxu0 0
        %979 = vmatprep.subr.bf16.mxu0 0
        %980 = vmatpush1.bf16.msra.mxu0 0
        %981 = vmatprep.subr.bf16.mxu0 0
        %982 = vmatpush1.bf16.msra.mxu0 0
        %983 = vmatprep.subr.bf16.mxu0 0
        %984 = vmatpush1.bf16.msra.mxu0 0
        %985 = vmatprep.subr.bf16.mxu0 0
        %986 = vmatpush1.bf16.msra.mxu0 0
        %987 = vmatprep.mubr.bf16.mxu0 0
        %988 = vmatmul.mubr.bf16.gmra.mrb[0].mxu0 %v936
        %v989 = vpop.f32.mrb[0].mxu0
        %v990 = vadd.f32 %v954, %v989
        %v991 = vpop.f32.mrb[0].mxu0
        %v992 = vpop.f32.mrb[0].mxu0
        %v993 = vpop.f32.mrb[0].mxu0
        %994 = vdwg.mxu0
        %995 = vst [vmem:[%s309] sm:$0x1] %v990
        %s996 = sand.u32 %s204, 1
        %s997 = scalar_lea.sflag [#allocation4], %s996
        %s998 = sand.u32 %s204, 1
        %s999 = scalar_lea.vmem [#allocation3], %s998
        // Predicated region
        $region49: #{tpu_custom_call.1} parent=47 // pred_check
          %p1000 = pneg %p214
        $region50: #{tpu_custom_call.1} parent=47 // pred_check_branch
          %1002 = sbr.rel (%p1000) target = $region52
        $region51: #{tpu_custom_call.1} parent=47 // pred_region
          %s1004 = ssub.s32 16, 16
          %1005 = vsyncadd %s997, %s1004
          %s1006 = sadd.s32 %s28, %s27
          %s1007 = smul.addr %s1006, 16
          %s1008 = scalar_lea.hbm %s7, %s1007
          %s1010 = sshll.u32 %s999, 4
          %s1011 = int_to_ptr.vmem [resolvable:$true] %s1010
          %1013 = dma.vmem_to_hbm [thread:$0]  %s1011, 16, %s1008, %s997
        $region52: #{tpu_custom_call.1} parent=47 // pred_fallthru
          _
      $region48: #{tpu_custom_call.1} parent=5 // pred_fallthru
        _
      %p1014 = scmp.le.s32.totalorder 2, %s18
      // Predicated region
      $region53: #{tpu_custom_call.1} parent=5 // pred_check
        %p1015 = pneg %p1014
      $region54: #{tpu_custom_call.1} parent=5 // pred_check_branch
        %1017 = sbr.rel (%p1015) target = $region56
      $region55: #{tpu_custom_call.1} parent=5 // pred_region
        %s1018 = ssub.s32 %s18, 2
        // Predicated region
        $region57: #{tpu_custom_call.1} parent=55 // pred_check
          %p1019 = pneg %p220
        $region58: #{tpu_custom_call.1} parent=55 // pred_check_branch
          %1021 = sbr.rel (%p1019) target = $region60
        $region59: #{tpu_custom_call.1} parent=55 // pred_region
          %s1022 = sand.u32 %s205, 1
          %s1023 = scalar_lea.sflag [#allocation4], %s1022
          %s1024 = sand.u32 %s205, 1
          %s1025 = scalar_lea.vmem [#allocation3], %s1024
          %1026 = dma.done %s1023, 16
        $region60: #{tpu_custom_call.1} parent=55 // pred_fallthru
          _
      $region56: #{tpu_custom_call.1} parent=5 // pred_fallthru
        _
    $region6: #{tpu_custom_call.1} parent=1 // loop_footer
      %s22 = sadd.s32 1, %s18
    $region7: #{tpu_custom_call.1} parent=1 // loop_footer_branch
      %17 = sbr.rel target = $region3
    $region8: #{tpu_custom_call.1} parent=1 // loop_exit
      _
    %1027 = vsyncpa [#allocation4], 1
    %s1028 = scalar_lea.sflag [#allocation4], 1
    %1029 = vsyncpa %s1028, 1

</llo_original>
